<compile_context>
chip_gen: v6e
topology: v6e:2x2x1
jax: 0.10.0
libtpu: 0.0.40
codegen_flags: <defaults>
</compile_context>

<pallas_src>
import numpy as np
import jax
import jax.numpy as jnp
from jax import lax
from jax.experimental import pallas as pl
from jax.experimental.pallas import tpu as pltpu

OUT_DIM = 4  # number of GridWorld actions


# ----------------------------- Pallas kernel -------------------------------
def dqn_kernel(x_ref, w1_ref, wc1_ref, w2_ref, wc2_ref, wf1_ref, wf2_ref, b_ref, out_ref):
    bf16 = jnp.bfloat16
    f32 = jnp.float32

    # Packed biases (f32): row 0 = conv1 (tiled x16), 1 = conv2 (repeat x4),
    # 2 = coord fc1, 3 = fc1 (+ folded bc2 @ Wf1b), 4 = fc2 (padded to 128 lanes).
    b1 = b_ref[0:1, :]          # (1, 256)
    b2 = b_ref[1:2, 0:128]      # (1, 128)
    bc1 = b_ref[2:3, 0:64]      # (1, 64)
    bf1 = b_ref[3:4, :]         # (1, 256)
    bf2 = b_ref[4:5, 0:128]     # (1, 128)

    # Single packed bf16 input tile: lanes 0:25 = flattened 5x5 visual, 25:29 = coord.
    x = x_ref[...]                                                         # (TB, 32) bf16

    # Conv1 with im2col + pool-survivor selection folded into the weight; ReLU.
    # Output lane = q*64 + p*16 + c (q = pos-in-pool-window, p = pool window, c = channel).
    h1 = jnp.dot(x, w1_ref[...], preferred_element_type=f32) + b1          # (TB, 256)
    h1 = jnp.maximum(h1, 0.0)

    # MaxPool2d(2,2): max over the four within-window positions q = four 64-lane chunks.
    pooled = jnp.maximum(jnp.maximum(h1[:, 0:64], h1[:, 64:128]),
                         jnp.maximum(h1[:, 128:192], h1[:, 192:256]))      # (TB, 64) lane = p*16 + c

    # Conv2 (pad=1 on the 2x2 pooled map) folded into one matmul + ReLU + Flatten.
    vis = jnp.dot(pooled.astype(bf16), w2_ref[...], preferred_element_type=f32) + b2
    vis = jnp.maximum(vis, 0.0)                                            # (TB, 128) torch Flatten order

    # coord_net: Linear -> ReLU -> Linear.  Wc1 is padded to 32 rows (zero rows for the
    # visual lanes) so the same packed input tile feeds it.  bc2 is folded into bf1.
    hc = jnp.maximum(jnp.dot(x, wc1_ref[...], preferred_element_type=f32) + bc1, 0.0)
    hc = jnp.dot(hc.astype(bf16), wc2_ref[...], preferred_element_type=f32)         # (TB, 64)

    # fc1: split matmul replaces the [vis, hc] lane concatenation (MXU accumulation is free).
    f = (jnp.dot(vis.astype(bf16), wf1_ref[0:128, :], preferred_element_type=f32)
         + jnp.dot(hc.astype(bf16), wf1_ref[128:192, :], preferred_element_type=f32)
         + bf1)
    f = jnp.maximum(f, 0.0)                                                # (TB, 256)

    # fc2, output padded to 128 lanes (lane-dense store); wrapper slices [:, :out_dim].
    out_ref[...] = jnp.dot(f.astype(bf16), wf2_ref[...], preferred_element_type=f32) + bf2


# ----------------------------- parameter setup ------------------------------
def init_params(key, out_dim=OUT_DIM):
    ks = jax.random.split(key, 12)
    p = {}
    p['W1'] = 0.1 * jax.random.normal(ks[0], (16, 1, 3, 3), jnp.float32)   # conv1, OIHW
    p['b1'] = 0.1 * jax.random.normal(ks[1], (16,), jnp.float32)
    p['W2'] = 0.1 * jax.random.normal(ks[2], (32, 16, 3, 3), jnp.float32)  # conv2, OIHW
    p['b2'] = 0.1 * jax.random.normal(ks[3], (32,), jnp.float32)
    # Linear weights stored as (in, out); PyTorch stores (out, in) and applies x @ W.T
    p['Wc1'] = 0.1 * jax.random.normal(ks[4], (4, 64), jnp.float32)
    p['bc1'] = 0.1 * jax.random.normal(ks[5], (64,), jnp.float32)
    p['Wc2'] = 0.1 * jax.random.normal(ks[6], (64, 64), jnp.float32)
    p['bc2'] = 0.1 * jax.random.normal(ks[7], (64,), jnp.float32)
    p['Wf1'] = 0.1 * jax.random.normal(ks[8], (192, 256), jnp.float32)
    p['bf1'] = 0.1 * jax.random.normal(ks[9], (256,), jnp.float32)
    p['Wf2'] = 0.1 * jax.random.normal(ks[10], (256, out_dim), jnp.float32)
    p['bf2'] = 0.1 * jax.random.normal(ks[11], (out_dim,), jnp.float32)
    return p


def _prepare_weights(p):
    """Fold convs / im2col / biases into matmul-ready bf16 weights (runs once on host)."""
    out_dim = p['Wf2'].shape[1]

    # Conv1 with the im2col gather folded into the weight.
    # Input lane  = raw flattened 5x5 pixel index (i*5 + j); lanes 25..31 are zero pad.
    # Output lane = pos*16 + c = q*64 + p*16 + c, restricted to the 16 pool-surviving
    # conv positions (oi<4, oj<4) so the pool is a max over the four q chunks.
    W1 = np.asarray(p['W1'], np.float32)                                   # (16, 1, 3, 3)
    W1fold = np.zeros((32, 256), np.float32)
    for q in range(4):
        di, dj = divmod(q, 2)
        for pw in range(4):
            r, s = divmod(pw, 2)
            oi, oj = 2 * r + di, 2 * s + dj          # conv1 output position
            pos = q * 4 + pw
            for kh in range(3):
                for kw in range(3):
                    ii, jj = oi + kh - 1, oj + kw - 1   # padding = 1
                    if 0 <= ii < 5 and 0 <= jj < 5:
                        W1fold[ii * 5 + jj, pos * 16:(pos + 1) * 16] += W1[:, 0, kh, kw]
    b1big = np.tile(np.asarray(p['b1'], np.float32), 16)                   # (256,)

    # Conv2 (pad=1 on 2x2 map): rows = pooled lane p*16+ci, cols = co*4 + oi*2 + oj
    # (torch Flatten order); every pooled position sees every output position.
    W2 = np.asarray(p['W2'], np.float32)                                   # (32, 16, 3, 3)
    W2mat = np.zeros((64, 128), np.float32)
    for r in range(2):
        for s in range(2):
            for oi in range(2):
                for oj in range(2):
                    rows = (r * 2 + s) * 16 + np.arange(16)
                    cols = np.arange(32) * 4 + oi * 2 + oj
                    W2mat[np.ix_(rows, cols)] = W2[:, :, r - oi + 1, s - oj + 1].T
    b2rep = np.repeat(np.asarray(p['b2'], np.float32), 4)                  # (128,)

    # coord Linear1 padded to 32 rows so it consumes the same packed (TB,32) input;
    # coord lives in lanes 25:29, visual lanes hit zero rows.
    Wc1pad = np.zeros((32, 64), np.float32)
    Wc1pad[25:29, :] = np.asarray(p['Wc1'], np.float32)

    # Fold coord_net's bc2 into fc1's bias (no ReLU in between):
    Wf1 = np.asarray(p['Wf1'], np.float32)                                 # (192, 256)
    bf1p = np.asarray(p['bf1'], np.float32) + np.asarray(p['bc2'], np.float32) @ Wf1[128:192]

    # fc2 padded to 128 output lanes (lane-dense store).
    Wf2p = np.zeros((256, 128), np.float32)
    Wf2p[:, :out_dim] = np.asarray(p['Wf2'], np.float32)
    bf2p = np.zeros((128,), np.float32)
    bf2p[:out_dim] = np.asarray(p['bf2'], np.float32)

    Bpack = np.zeros((8, 256), np.float32)
    Bpack[0] = b1big
    Bpack[1, :128] = b2rep
    Bpack[2, :64] = np.asarray(p['bc1'], np.float32)
    Bpack[3] = bf1p
    Bpack[4, :128] = bf2p

    bf16 = jnp.bfloat16
    return dict(
        W1fold=jnp.asarray(W1fold, bf16),
        Wc1pad=jnp.asarray(Wc1pad, bf16),
        W2mat=jnp.asarray(W2mat, bf16),
        Wc2=jnp.asarray(np.asarray(p['Wc2'], np.float32), bf16),
        Wf1=jnp.asarray(Wf1, bf16),
        Wf2p=jnp.asarray(Wf2p, bf16),
        Bpack=jnp.asarray(Bpack),
    )


def _round_up(n, m):
    return ((n + m - 1) // m) * m


# ------------------------------ wrapper --------------------------------------
def dqn_forward(visual, coord, p, tile_b=512):
    B = visual.shape[0]
    out_dim = p['Wf2'].shape[1]
    prep = _prepare_weights(p)

    # Batch tiling: TILE_B samples per grid step (sublane-aligned). Cap TB so larger
    # batches produce at least 2 grid steps (v7x: shard batch axis over both TCs).
    Bp8 = _round_up(B, 8)
    half = _round_up(-(-Bp8 // 2), 8)
    TB = max(8, min(tile_b, half))
    Bp = _round_up(B, TB)

    # Pack raw flattened 5x5 visual (lanes 0:25) + coord (lanes 25:29) into one bf16
    # (Bp, 32) stream; no host-side im2col (it is folded into W1fold).
    vis_flat = visual.reshape(B, -1).astype(jnp.bfloat16)                  # (B, 25)
    xin = jnp.concatenate(
        [vis_flat, coord.astype(jnp.bfloat16), jnp.zeros((B, 3), jnp.bfloat16)], axis=1)
    xin = jnp.pad(xin, ((0, Bp - B), (0, 0)))                              # (Bp, 32)

    def full(shape):
        return pl.BlockSpec(shape, lambda b: (0,) * len(shape))

    # Advisory cost model for the XLA scheduler around the custom call.
    macs = 32 * 256 + 32 * 64 + 64 * 64 + 64 * 128 + 128 * 256 + 64 * 256 + 256 * 128
    weight_bytes = 2 * (32 * 256 + 32 * 64 + 64 * 128 + 64 * 64 + 192 * 256 + 256 * 128) + 4 * 8 * 256
    cost = pl.CostEstimate(
        flops=2 * macs * Bp,
        transcendentals=0,
        bytes_accessed=Bp * (32 * 2 + 128 * 4) + weight_bytes,
    )

    out = pl.pallas_call(
        dqn_kernel,
        out_shape=jax.ShapeDtypeStruct((Bp, 128), jnp.float32),
        grid_spec=pltpu.PrefetchScalarGridSpec(
            num_scalar_prefetch=0,
            grid=(Bp // TB,),
            in_specs=[
                pl.BlockSpec((TB, 32), lambda b: (b, 0)),  # packed visual+coord, bf16
                full((32, 256)),              # conv1 (im2col + pool-select fold), bf16
                full((32, 64)),               # coord linear 1 (row-padded), bf16
                full((64, 128)),              # conv2 (folded), bf16
                full((64, 64)),               # coord linear 2, bf16
                full((192, 256)),             # fc linear 1, bf16 (sliced in-kernel)
                full((256, 128)),             # fc linear 2 (padded to 128 lanes), bf16
                full((8, 256)),               # packed biases, f32
            ],
            out_specs=pl.BlockSpec((TB, 128), lambda b: (b, 0)),
        ),
        compiler_params=pltpu.CompilerParams(dimension_semantics=("parallel",)),
        cost_estimate=cost,
    )(xin, prep['W1fold'], prep['Wc1pad'], prep['W2mat'], prep['Wc2'],
      prep['Wf1'], prep['Wf2p'], prep['Bpack'])
    return out[:B, :out_dim]


# ------------------------- pure-JAX reference (check) ------------------------
def ref_forward(visual, coord, p):
    h = lax.conv_general_dilated(visual, p['W1'], (1, 1), ((1, 1), (1, 1)),
                                 dimension_numbers=('NCHW', 'OIHW', 'NCHW'))
    h = jax.nn.relu(h + p['b1'][None, :, None, None])
    h = lax.reduce_window(h, -jnp.inf, lax.max, (1, 1, 2, 2), (1, 1, 2, 2), 'VALID')
    h = lax.conv_general_dilated(h, p['W2'], (1, 1), ((1, 1), (1, 1)),
                                 dimension_numbers=('NCHW', 'OIHW', 'NCHW'))
    h = jax.nn.relu(h + p['b2'][None, :, None, None])
    vis = h.reshape(h.shape[0], -1)                         # torch Flatten order (c, i, j)
    c = jax.nn.relu(coord @ p['Wc1'] + p['bc1'])
    c = c @ p['Wc2'] + p['bc2']
    comb = jnp.concatenate([vis, c], axis=1)
    f = jax.nn.relu(comb @ p['Wf1'] + p['bf1'])
    return f @ p['Wf2'] + p['bf2']


if __name__ == "__main__":
    key = jax.random.PRNGKey(0)
    k_vis, k_coord, k_param = jax.random.split(key, 3)
    params = init_params(k_param, OUT_DIM)

    # Small demo batch (single grid step, padded to the sublane-aligned tile).
    B = 2
    visual = jax.random.uniform(k_vis, (B, 1, 5, 5), dtype=jnp.float32)   # NCHW
    coord = jax.random.uniform(k_coord, (B, 4), dtype=jnp.float32)
    out = jax.block_until_ready(dqn_forward(visual, coord, params))
    ref = jax.block_until_ready(ref_forward(visual, coord, params))
    # bf16 inputs/matmuls with f32 accumulation -> compare against the f32 reference at 2e-2.
    np.testing.assert_allclose(np.asarray(out), np.asarray(ref), rtol=2e-2, atol=2e-2)

    # Also exercise the multi-step batched grid (padding + parallel batch axis).
    B2 = 100
    visual2 = jax.random.uniform(k_vis, (B2, 1, 5, 5), dtype=jnp.float32)
    coord2 = jax.random.uniform(k_coord, (B2, 4), dtype=jnp.float32)
    out2 = jax.block_until_ready(dqn_forward(visual2, coord2, params, tile_b=32))
    ref2 = jax.block_until_ready(ref_forward(visual2, coord2, params))
    np.testing.assert_allclose(np.asarray(out2), np.asarray(ref2), rtol=2e-2, atol=2e-2)

    print("KERNEL_OK")
</pallas_src>

<mosaic_0001>
module attributes {stable_mosaic.version = 11 : i64} {
  func.func @dqn_kernel(%arg0: i32, %arg1: memref<8x32xbf16, #tpu.memory_space<vmem>>, %arg2: memref<32x256xbf16, #tpu.memory_space<vmem>>, %arg3: memref<32x64xbf16, #tpu.memory_space<vmem>>, %arg4: memref<64x128xbf16, #tpu.memory_space<vmem>>, %arg5: memref<64x64xbf16, #tpu.memory_space<vmem>>, %arg6: memref<192x256xbf16, #tpu.memory_space<vmem>>, %arg7: memref<256x128xbf16, #tpu.memory_space<vmem>>, %arg8: memref<8x256xf32, #tpu.memory_space<vmem>>, %arg9: memref<8x128xf32, #tpu.memory_space<vmem>>) attributes {dimension_semantics = [#tpu.dimension_semantics<parallel>], iteration_bounds = array<i64: 1>, scalar_prefetch = 0 : i64, scratch_operands = 0 : i64, tpu.core_type = #tpu.core_type<tc>, window_params = [{transform_indices = @transform_0, window_bounds = array<i64: 8, 32>}, {pipeline_mode = #tpu.pipeline_mode<synchronous>, transform_indices = @transform_1, window_bounds = array<i64: 32, 256>}, {pipeline_mode = #tpu.pipeline_mode<synchronous>, transform_indices = @transform_2, window_bounds = array<i64: 32, 64>}, {pipeline_mode = #tpu.pipeline_mode<synchronous>, transform_indices = @transform_3, window_bounds = array<i64: 64, 128>}, {pipeline_mode = #tpu.pipeline_mode<synchronous>, transform_indices = @transform_4, window_bounds = array<i64: 64, 64>}, {pipeline_mode = #tpu.pipeline_mode<synchronous>, transform_indices = @transform_5, window_bounds = array<i64: 192, 256>}, {pipeline_mode = #tpu.pipeline_mode<synchronous>, transform_indices = @transform_6, window_bounds = array<i64: 256, 128>}, {pipeline_mode = #tpu.pipeline_mode<synchronous>, transform_indices = @transform_7, window_bounds = array<i64: 8, 256>}, {transform_indices = @transform_8, window_bounds = array<i64: 8, 128>}]} {
    %c0 = arith.constant 0 : index
    %c0_0 = arith.constant 0 : index
    %0 = vector.load %arg8[%c0, %c0_0] : memref<8x256xf32, #tpu.memory_space<vmem>>, vector<1x256xf32>
    %c1 = arith.constant 1 : index
    %c0_1 = arith.constant 0 : index
    %1 = vector.load %arg8[%c1, %c0_1] : memref<8x256xf32, #tpu.memory_space<vmem>>, vector<1x128xf32>
    %c2 = arith.constant 2 : index
    %c0_2 = arith.constant 0 : index
    %2 = vector.load %arg8[%c2, %c0_2] : memref<8x256xf32, #tpu.memory_space<vmem>>, vector<1x64xf32>
    %c3 = arith.constant 3 : index
    %c0_3 = arith.constant 0 : index
    %3 = vector.load %arg8[%c3, %c0_3] : memref<8x256xf32, #tpu.memory_space<vmem>>, vector<1x256xf32>
    %c4 = arith.constant 4 : index
    %c0_4 = arith.constant 0 : index
    %4 = vector.load %arg8[%c4, %c0_4] : memref<8x256xf32, #tpu.memory_space<vmem>>, vector<1x128xf32>
    %c0_5 = arith.constant 0 : index
    %c0_6 = arith.constant 0 : index
    %5 = vector.load %arg1[%c0_5, %c0_6] : memref<8x32xbf16, #tpu.memory_space<vmem>>, vector<8x32xbf16>
    %c0_7 = arith.constant 0 : index
    %c0_8 = arith.constant 0 : index
    %6 = vector.load %arg2[%c0_7, %c0_8] : memref<32x256xbf16, #tpu.memory_space<vmem>>, vector<32x256xbf16>
    %cst = arith.constant dense<0.000000e+00> : vector<8x256xf32>
    %7 = tpu.matmul %5, %6, %cst {dimension_numbers = #tpu.dot_dimension_numbers<[1], [0], [0], [1], [0, 0, 1, 1], [], []>} : vector<8x32xbf16>, vector<32x256xbf16>, vector<8x256xf32> -> vector<8x256xf32>
    %8 = vector.broadcast %0 : vector<1x256xf32> to vector<8x256xf32>
    %9 = arith.addf %7, %8 : vector<8x256xf32>
    %cst_9 = arith.constant 0.000000e+00 : f32
    %10 = vector.broadcast %cst_9 : f32 to vector<8x256xf32>
    %11 = arith.maximumf %9, %10 : vector<8x256xf32>
    %12 = vector.extract_strided_slice %11 {offsets = [0, 0], sizes = [8, 64], strides = [1, 1]} : vector<8x256xf32> to vector<8x64xf32>
    %13 = vector.extract_strided_slice %11 {offsets = [0, 64], sizes = [8, 64], strides = [1, 1]} : vector<8x256xf32> to vector<8x64xf32>
    %14 = arith.maximumf %12, %13 : vector<8x64xf32>
    %15 = vector.extract_strided_slice %11 {offsets = [0, 128], sizes = [8, 64], strides = [1, 1]} : vector<8x256xf32> to vector<8x64xf32>
    %16 = vector.extract_strided_slice %11 {offsets = [0, 192], sizes = [8, 64], strides = [1, 1]} : vector<8x256xf32> to vector<8x64xf32>
    %17 = arith.maximumf %15, %16 : vector<8x64xf32>
    %18 = arith.maximumf %14, %17 : vector<8x64xf32>
    %19 = arith.truncf %18 : vector<8x64xf32> to vector<8x64xbf16>
    %c0_10 = arith.constant 0 : index
    %c0_11 = arith.constant 0 : index
    %20 = vector.load %arg4[%c0_10, %c0_11] : memref<64x128xbf16, #tpu.memory_space<vmem>>, vector<64x128xbf16>
    %cst_12 = arith.constant dense<0.000000e+00> : vector<8x128xf32>
    %21 = tpu.matmul %19, %20, %cst_12 {dimension_numbers = #tpu.dot_dimension_numbers<[1], [0], [0], [1], [0, 0, 1, 1], [], []>} : vector<8x64xbf16>, vector<64x128xbf16>, vector<8x128xf32> -> vector<8x128xf32>
    %22 = vector.broadcast %1 : vector<1x128xf32> to vector<8x128xf32>
    %23 = arith.addf %21, %22 : vector<8x128xf32>
    %cst_13 = arith.constant 0.000000e+00 : f32
    %24 = vector.broadcast %cst_13 : f32 to vector<8x128xf32>
    %25 = arith.maximumf %23, %24 : vector<8x128xf32>
    %c0_14 = arith.constant 0 : index
    %c0_15 = arith.constant 0 : index
    %26 = vector.load %arg3[%c0_14, %c0_15] : memref<32x64xbf16, #tpu.memory_space<vmem>>, vector<32x64xbf16>
    %cst_16 = arith.constant dense<0.000000e+00> : vector<8x64xf32>
    %27 = tpu.matmul %5, %26, %cst_16 {dimension_numbers = #tpu.dot_dimension_numbers<[1], [0], [0], [1], [0, 0, 1, 1], [], []>} : vector<8x32xbf16>, vector<32x64xbf16>, vector<8x64xf32> -> vector<8x64xf32>
    %28 = vector.broadcast %2 : vector<1x64xf32> to vector<8x64xf32>
    %29 = arith.addf %27, %28 : vector<8x64xf32>
    %cst_17 = arith.constant 0.000000e+00 : f32
    %30 = vector.broadcast %cst_17 : f32 to vector<8x64xf32>
    %31 = arith.maximumf %29, %30 : vector<8x64xf32>
    %32 = arith.truncf %31 : vector<8x64xf32> to vector<8x64xbf16>
    %c0_18 = arith.constant 0 : index
    %c0_19 = arith.constant 0 : index
    %33 = vector.load %arg5[%c0_18, %c0_19] : memref<64x64xbf16, #tpu.memory_space<vmem>>, vector<64x64xbf16>
    %cst_20 = arith.constant dense<0.000000e+00> : vector<8x64xf32>
    %34 = tpu.matmul %32, %33, %cst_20 {dimension_numbers = #tpu.dot_dimension_numbers<[1], [0], [0], [1], [0, 0, 1, 1], [], []>} : vector<8x64xbf16>, vector<64x64xbf16>, vector<8x64xf32> -> vector<8x64xf32>
    %35 = arith.truncf %25 : vector<8x128xf32> to vector<8x128xbf16>
    %c0_21 = arith.constant 0 : index
    %c0_22 = arith.constant 0 : index
    %36 = vector.load %arg6[%c0_21, %c0_22] : memref<192x256xbf16, #tpu.memory_space<vmem>>, vector<128x256xbf16>
    %cst_23 = arith.constant dense<0.000000e+00> : vector<8x256xf32>
    %37 = tpu.matmul %35, %36, %cst_23 {dimension_numbers = #tpu.dot_dimension_numbers<[1], [0], [0], [1], [0, 0, 1, 1], [], []>} : vector<8x128xbf16>, vector<128x256xbf16>, vector<8x256xf32> -> vector<8x256xf32>
    %38 = arith.truncf %34 : vector<8x64xf32> to vector<8x64xbf16>
    %c128 = arith.constant 128 : index
    %c0_24 = arith.constant 0 : index
    %39 = vector.load %arg6[%c128, %c0_24] : memref<192x256xbf16, #tpu.memory_space<vmem>>, vector<64x256xbf16>
    %cst_25 = arith.constant dense<0.000000e+00> : vector<8x256xf32>
    %40 = tpu.matmul %38, %39, %cst_25 {dimension_numbers = #tpu.dot_dimension_numbers<[1], [0], [0], [1], [0, 0, 1, 1], [], []>} : vector<8x64xbf16>, vector<64x256xbf16>, vector<8x256xf32> -> vector<8x256xf32>
    %41 = arith.addf %37, %40 : vector<8x256xf32>
    %42 = vector.broadcast %3 : vector<1x256xf32> to vector<8x256xf32>
    %43 = arith.addf %41, %42 : vector<8x256xf32>
    %cst_26 = arith.constant 0.000000e+00 : f32
    %44 = vector.broadcast %cst_26 : f32 to vector<8x256xf32>
    %45 = arith.maximumf %43, %44 : vector<8x256xf32>
    %46 = arith.truncf %45 : vector<8x256xf32> to vector<8x256xbf16>
    %c0_27 = arith.constant 0 : index
    %c0_28 = arith.constant 0 : index
    %47 = vector.load %arg7[%c0_27, %c0_28] : memref<256x128xbf16, #tpu.memory_space<vmem>>, vector<256x128xbf16>
    %cst_29 = arith.constant dense<0.000000e+00> : vector<8x128xf32>
    %48 = tpu.matmul %46, %47, %cst_29 {dimension_numbers = #tpu.dot_dimension_numbers<[1], [0], [0], [1], [0, 0, 1, 1], [], []>} : vector<8x256xbf16>, vector<256x128xbf16>, vector<8x128xf32> -> vector<8x128xf32>
    %49 = vector.broadcast %4 : vector<1x128xf32> to vector<8x128xf32>
    %50 = arith.addf %48, %49 : vector<8x128xf32>
    %c0_30 = arith.constant 0 : index
    %c0_31 = arith.constant 0 : index
    %51 = vector.load %arg9[%c0_30, %c0_31] : memref<8x128xf32, #tpu.memory_space<vmem>>, vector<8x128xf32>
    tpu.vector_store %arg9[%c0_30, %c0_31], %50 {strides = array<i32>} : memref<8x128xf32, #tpu.memory_space<vmem>>, vector<8x128xf32>,
    return
  }
  func.func @transform_0(%arg0: i32) -> (i32, i32) {
    %c0_i32 = arith.constant 0 : i32
    %c0_i32_0 = arith.constant 0 : i32
    return %arg0, %c0_i32 : i32, i32
  }
  func.func @transform_1(%arg0: i32) -> (i32, i32) {
    %c0_i32 = arith.constant 0 : i32
    %c0_i32_0 = arith.constant 0 : i32
    %c0_i32_1 = arith.constant 0 : i32
    return %c0_i32, %c0_i32_0 : i32, i32
  }
  func.func @transform_2(%arg0: i32) -> (i32, i32) {
    %c0_i32 = arith.constant 0 : i32
    %c0_i32_0 = arith.constant 0 : i32
    %c0_i32_1 = arith.constant 0 : i32
    return %c0_i32, %c0_i32_0 : i32, i32
  }
  func.func @transform_3(%arg0: i32) -> (i32, i32) {
    %c0_i32 = arith.constant 0 : i32
    %c0_i32_0 = arith.constant 0 : i32
    %c0_i32_1 = arith.constant 0 : i32
    return %c0_i32, %c0_i32_0 : i32, i32
  }
  func.func @transform_4(%arg0: i32) -> (i32, i32) {
    %c0_i32 = arith.constant 0 : i32
    %c0_i32_0 = arith.constant 0 : i32
    %c0_i32_1 = arith.constant 0 : i32
    return %c0_i32, %c0_i32_0 : i32, i32
  }
  func.func @transform_5(%arg0: i32) -> (i32, i32) {
    %c0_i32 = arith.constant 0 : i32
    %c0_i32_0 = arith.constant 0 : i32
    %c0_i32_1 = arith.constant 0 : i32
    return %c0_i32, %c0_i32_0 : i32, i32
  }
  func.func @transform_6(%arg0: i32) -> (i32, i32) {
    %c0_i32 = arith.constant 0 : i32
    %c0_i32_0 = arith.constant 0 : i32
    %c0_i32_1 = arith.constant 0 : i32
    return %c0_i32, %c0_i32_0 : i32, i32
  }
  func.func @transform_7(%arg0: i32) -> (i32, i32) {
    %c0_i32 = arith.constant 0 : i32
    %c0_i32_0 = arith.constant 0 : i32
    %c0_i32_1 = arith.constant 0 : i32
    return %c0_i32, %c0_i32_0 : i32, i32
  }
  func.func @transform_8(%arg0: i32) -> (i32, i32) {
    %c0_i32 = arith.constant 0 : i32
    %c0_i32_0 = arith.constant 0 : i32
    return %arg0, %c0_i32 : i32, i32
  }
}

</mosaic_0001>

<llo_original>
// kernel: tpu_custom_call.1
$region0: #{tpu_custom_call.1}
  #allocation0 [shape = 'u32[]', space=smem, size = 0x4, offset = 0x4, fixed_abs, tag = 'smem constant byte address 0x4 - core index']
  #allocation1 [shape = 'u32[144,128]{1,0:T(1,128)}', space=vmem, size = 0x12000, scoped, tag = 'internal scratch']
  %s0 = inlined_call_operand.hbm [shape: bf16[8,32], index: 0, kind: input, shape index: {}]
  %s1 = inlined_call_operand.hbm [shape: bf16[32,256], index: 1, kind: input, shape index: {}]
  %s2 = inlined_call_operand.hbm [shape: bf16[32,64], index: 2, kind: input, shape index: {}]
  %s3 = inlined_call_operand.hbm [shape: bf16[64,128], index: 3, kind: input, shape index: {}]
  %s4 = inlined_call_operand.hbm [shape: bf16[64,64], index: 4, kind: input, shape index: {}]
  %s5 = inlined_call_operand.hbm [shape: bf16[192,256], index: 5, kind: input, shape index: {}]
  %s6 = inlined_call_operand.hbm [shape: bf16[256,128], index: 6, kind: input, shape index: {}]
  %s7 = inlined_call_operand.hbm [shape: f32[8,256], index: 7, kind: input, shape index: {}]
  %s8 = inlined_call_operand.hbm [shape: f32[8,128], index: 8, kind: output, shape index: {}]
  %s9 = sld [smem:[#allocation0]]
  $region74: #{tpu_custom_call.1} parent=0
    _
  %s11 = ssub.s32 1, %s9
  %s12 = scalar_select 0, %s11, %s9
  $region1: #{tpu_custom_call.1} parent=0
    #allocation2 [shape = 'u8[2048]{0}', space=vmem, size = 0x800, scoped, tag = 'input window, operand 0, single buffered']
    #allocation3 [shape = 's32[1]{0}', space=sflag, size = 0x4, scoped, tag = 'scoped memory for tpu_custom_call.1']
    #allocation4 [shape = 's32[1]{0}', space=sflag, size = 0x4, scoped, tag = 'scoped memory for tpu_custom_call.1']
    #allocation5 [shape = 'u8[16384]{0}', space=vmem, size = 0x4000, scoped, tag = 'input window, operand 1, single buffered']
    #allocation6 [shape = 's32[1]{0}', space=sflag, size = 0x4, scoped, tag = 'scoped memory for tpu_custom_call.1']
    #allocation7 [shape = 'u8[8192]{0}', space=vmem, size = 0x2000, scoped, tag = 'input window, operand 2, single buffered']
    #allocation8 [shape = 'u8[16384]{0}', space=vmem, size = 0x4000, scoped, tag = 'input window, operand 3, single buffered']
    #allocation9 [shape = 's32[1]{0}', space=sflag, size = 0x4, scoped, tag = 'scoped memory for tpu_custom_call.1']
    #allocation10 [shape = 'u8[16384]{0}', space=vmem, size = 0x4000, scoped, tag = 'input window, operand 4, single buffered']
    #allocation11 [shape = 'u8[98304]{0}', space=vmem, size = 0x18000, scoped, tag = 'input window, operand 5, single buffered']
    #allocation12 [shape = 's32[1]{0}', space=sflag, size = 0x4, scoped, tag = 'scoped memory for tpu_custom_call.1']
    #allocation13 [shape = 'u8[65536]{0}', space=vmem, size = 0x10000, scoped, tag = 'input window, operand 6, single buffered']
    #allocation14 [shape = 'u8[8192]{0}', space=vmem, size = 0x2000, scoped, tag = 'input window, operand 7, single buffered']
    #allocation15 [shape = 's32[1]{0}', space=sflag, size = 0x4, scoped, tag = 'scoped memory for tpu_custom_call.1']
    #allocation16 [shape = 'u8[4096]{0}', space=vmem, size = 0x1000, scoped, tag = 'output window, operand 0, single buffered']
    %13 = vsyncpa [#allocation3], 0
    %14 = vsyncpa [#allocation6], 0
    %15 = vsyncpa [#allocation9], 0
    %16 = vsyncpa [#allocation12], 0
    %17 = vsyncpa [#allocation15], 0
    %18 = vsyncpa [#allocation4], 0
    // Predicated region
    $region2: #{tpu_custom_call.1} parent=1 // pred_check
      _
    $region3: #{tpu_custom_call.1} parent=1 // pred_check_branch
      %20 = sbr.rel (0) target = $region5
    $region4: #{tpu_custom_call.1} parent=1 // pred_region
      %s22 = ssub.s32 64, 64
      %23 = vsyncadd [#allocation3], %s22
      %s25 = sshll.u32 [#allocation2], 4
      %s26 = int_to_ptr.vmem [resolvable:$true] %s25
      %28 = dma.hbm_to_vmem [thread:$0]  %s0, 64, %s26, [#allocation3]
    $region5: #{tpu_custom_call.1} parent=1 // pred_fallthru
      _
    // Predicated region
    $region6: #{tpu_custom_call.1} parent=1 // pred_check
      _
    $region7: #{tpu_custom_call.1} parent=1 // pred_check_branch
      %30 = sbr.rel (0) target = $region9
    $region8: #{tpu_custom_call.1} parent=1 // pred_region
      %s32 = ssub.s32 512, 512
      %33 = vsyncadd [#allocation6], %s32
      %s34 = sshll.u32 [#allocation5], 4
      %s35 = int_to_ptr.vmem [resolvable:$true] %s34
      %40 = dma.hbm_to_vmem [thread:$0]  %s1, 512, %s35, [#allocation6], 128, 128, 8
    $region9: #{tpu_custom_call.1} parent=1 // pred_fallthru
      _
    // Predicated region
    $region10: #{tpu_custom_call.1} parent=1 // pred_check
      _
    $region11: #{tpu_custom_call.1} parent=1 // pred_check_branch
      %42 = sbr.rel (0) target = $region13
    $region12: #{tpu_custom_call.1} parent=1 // pred_region
      %s44 = ssub.s32 256, 256
      %45 = vsyncadd [#allocation6], %s44
      %s46 = sshll.u32 [#allocation7], 4
      %s47 = int_to_ptr.vmem [resolvable:$true] %s46
      %52 = dma.hbm_to_vmem [thread:$0]  %s2, 256, %s47, [#allocation6], 64, 64, 4
    $region13: #{tpu_custom_call.1} parent=1 // pred_fallthru
      _
    // Predicated region
    $region14: #{tpu_custom_call.1} parent=1 // pred_check
      _
    $region15: #{tpu_custom_call.1} parent=1 // pred_check_branch
      %54 = sbr.rel (0) target = $region17
    $region16: #{tpu_custom_call.1} parent=1 // pred_region
      %s56 = ssub.s32 512, 512
      %57 = vsyncadd [#allocation9], %s56
      %s58 = sshll.u32 [#allocation8], 4
      %s59 = int_to_ptr.vmem [resolvable:$true] %s58
      %64 = dma.hbm_to_vmem [thread:$0]  %s3, 512, %s59, [#allocation9], 64, 64, 4
    $region17: #{tpu_custom_call.1} parent=1 // pred_fallthru
      _
    // Predicated region
    $region18: #{tpu_custom_call.1} parent=1 // pred_check
      _
    $region19: #{tpu_custom_call.1} parent=1 // pred_check_branch
      %66 = sbr.rel (0) target = $region21
    $region20: #{tpu_custom_call.1} parent=1 // pred_region
      %s68 = ssub.s32 512, 512
      %69 = vsyncadd [#allocation9], %s68
      %s70 = sshll.u32 [#allocation10], 4
      %s71 = int_to_ptr.vmem [resolvable:$true] %s70
      %76 = dma.hbm_to_vmem [thread:$0]  %s4, 512, %s71, [#allocation9], 64, 64, 4
    $region21: #{tpu_custom_call.1} parent=1 // pred_fallthru
      _
    // Predicated region
    $region22: #{tpu_custom_call.1} parent=1 // pred_check
      _
    $region23: #{tpu_custom_call.1} parent=1 // pred_check_branch
      %78 = sbr.rel (0) target = $region25
    $region24: #{tpu_custom_call.1} parent=1 // pred_region
      %s80 = ssub.s32 3072, 3072
      %81 = vsyncadd [#allocation12], %s80
      %s82 = sshll.u32 [#allocation11], 4
      %s83 = int_to_ptr.vmem [resolvable:$true] %s82
      %88 = dma.hbm_to_vmem [thread:$0]  %s5, 3072, %s83, [#allocation12], 128, 128, 8
    $region25: #{tpu_custom_call.1} parent=1 // pred_fallthru
      _
    // Predicated region
    $region26: #{tpu_custom_call.1} parent=1 // pred_check
      _
    $region27: #{tpu_custom_call.1} parent=1 // pred_check_branch
      %90 = sbr.rel (0) target = $region29
    $region28: #{tpu_custom_call.1} parent=1 // pred_region
      %s92 = ssub.s32 2048, 2048
      %93 = vsyncadd [#allocation12], %s92
      %s94 = sshll.u32 [#allocation13], 4
      %s95 = int_to_ptr.vmem [resolvable:$true] %s94
      %100 = dma.hbm_to_vmem [thread:$0]  %s6, 2048, %s95, [#allocation12], 64, 64, 4
    $region29: #{tpu_custom_call.1} parent=1 // pred_fallthru
      _
    // Predicated region
    $region30: #{tpu_custom_call.1} parent=1 // pred_check
      _
    $region31: #{tpu_custom_call.1} parent=1 // pred_check_branch
      %102 = sbr.rel (0) target = $region33
    $region32: #{tpu_custom_call.1} parent=1 // pred_region
      %s104 = ssub.s32 256, 256
      %105 = vsyncadd [#allocation15], %s104
      %s107 = sshll.u32 [#allocation14], 4
      %s108 = int_to_ptr.vmem [resolvable:$true] %s107
      %110 = dma.hbm_to_vmem [thread:$0]  %s7, 256, %s108, [#allocation15]
    $region33: #{tpu_custom_call.1} parent=1 // pred_fallthru
      _
    // Predicated region
    $region34: #{tpu_custom_call.1} parent=1 // pred_check
      _
    $region35: #{tpu_custom_call.1} parent=1 // pred_check_branch
      %112 = sbr.rel (0) target = $region37
    $region36: #{tpu_custom_call.1} parent=1 // pred_region
      %113 = dma.done [#allocation3], 64
    $region37: #{tpu_custom_call.1} parent=1 // pred_fallthru
      _
    // Predicated region
    $region38: #{tpu_custom_call.1} parent=1 // pred_check
      _
    $region39: #{tpu_custom_call.1} parent=1 // pred_check_branch
      %115 = sbr.rel (0) target = $region41
    $region40: #{tpu_custom_call.1} parent=1 // pred_region
      %116 = dma.done [#allocation6], 512
    $region41: #{tpu_custom_call.1} parent=1 // pred_fallthru
      _
    // Predicated region
    $region42: #{tpu_custom_call.1} parent=1 // pred_check
      _
    $region43: #{tpu_custom_call.1} parent=1 // pred_check_branch
      %118 = sbr.rel (0) target = $region45
    $region44: #{tpu_custom_call.1} parent=1 // pred_region
      %119 = dma.done [#allocation6], 256
    $region45: #{tpu_custom_call.1} parent=1 // pred_fallthru
      _
    // Predicated region
    $region46: #{tpu_custom_call.1} parent=1 // pred_check
      _
    $region47: #{tpu_custom_call.1} parent=1 // pred_check_branch
      %121 = sbr.rel (0) target = $region49
    $region48: #{tpu_custom_call.1} parent=1 // pred_region
      %122 = dma.done [#allocation9], 512
    $region49: #{tpu_custom_call.1} parent=1 // pred_fallthru
      _
    // Predicated region
    $region50: #{tpu_custom_call.1} parent=1 // pred_check
      _
    $region51: #{tpu_custom_call.1} parent=1 // pred_check_branch
      %124 = sbr.rel (0) target = $region53
    $region52: #{tpu_custom_call.1} parent=1 // pred_region
      %125 = dma.done [#allocation9], 512
    $region53: #{tpu_custom_call.1} parent=1 // pred_fallthru
      _
    // Predicated region
    $region54: #{tpu_custom_call.1} parent=1 // pred_check
      _
    $region55: #{tpu_custom_call.1} parent=1 // pred_check_branch
      %127 = sbr.rel (0) target = $region57
    $region56: #{tpu_custom_call.1} parent=1 // pred_region
      %128 = dma.done [#allocation12], 3072
    $region57: #{tpu_custom_call.1} parent=1 // pred_fallthru
      _
    // Predicated region
    $region58: #{tpu_custom_call.1} parent=1 // pred_check
      _
    $region59: #{tpu_custom_call.1} parent=1 // pred_check_branch
      %130 = sbr.rel (0) target = $region61
    $region60: #{tpu_custom_call.1} parent=1 // pred_region
      %131 = dma.done [#allocation12], 2048
    $region61: #{tpu_custom_call.1} parent=1 // pred_fallthru
      _
    // Predicated region
    $region62: #{tpu_custom_call.1} parent=1 // pred_check
      _
    $region63: #{tpu_custom_call.1} parent=1 // pred_check_branch
      %133 = sbr.rel (0) target = $region65
    $region64: #{tpu_custom_call.1} parent=1 // pred_region
      %134 = dma.done [#allocation15], 256
    $region65: #{tpu_custom_call.1} parent=1 // pred_fallthru
      _
    %v136 = vld [vmem:[#allocation14] ss:$8 sm:$0x3]
    %v137 = vld [vmem:[#allocation14 + $0x1] ss:$0 sm:$0xff]
    %v138 = vld [vmem:[#allocation14 + $0x2] ss:$0 sm:$0xff]
    %s139 = scalar_lea.vmem [#allocation14], 3
    %v140 = vld [vmem:[%s139] ss:$8 sm:$0x3]
    %v141 = vld [vmem:[#allocation14 + $0x4] ss:$0 sm:$0xff]
    %v142 = vld [vmem:[#allocation2] sm:$0xf]
    %v143 = vld [vmem:[#allocation5] sm:$0xff]
    %v144 = vld [vmem:[#allocation5 + $0x8] sm:$0xff]
    %v145 = vld [vmem:[#allocation5 + $0x10] sm:$0xff]
    %v146 = vld [vmem:[#allocation5 + $0x18] sm:$0xff]
    %v148 = vlaneseq
    %v149 = vshrl.u32 %v148, 7
    %v150 = vsub.s32 0, %v149
    %v151 = vrot.slane %v136, %v150
    %v152 = vlaneseq
    %v153 = vshrl.u32 %v152, 7
    %v154 = vsub.s32 1, %v153
    %v155 = vrot.slane %v136, %v154
    %v162 = vunpack.c.l.b16 %v143
    %v163 = vunpack.c.h.b16 %v143
    %v164 = vunpack.c.l.b16 %v144
    %v165 = vunpack.c.h.b16 %v144
    %v166 = vunpack.c.l.b16 %v145
    %v167 = vunpack.c.h.b16 %v145
    %v168 = vunpack.c.l.b16 %v146
    %v169 = vunpack.c.h.b16 %v146
    %v170 = vpack.c.b16 %v164, %v162
    %v171 = vpack.c.b16 %v165, %v163
    %v172 = vpack.c.b16 %v168, %v166
    %v173 = vpack.c.b16 %v169, %v167
    %vm178 = vcmask 261120
    %v180 = vsel %vm178, %v142, 0
    %182 = vmatprep.subr.bf16.mxu0 0
    %183 = vmatpush1.bf16.msra.mxu0 0
    %184 = vmatprep.subr.bf16.mxu0 0
    %185 = vmatpush1.bf16.msra.mxu0 0
    %186 = vmatprep.subr.bf16.mxu0 0
    %187 = vmatpush1.bf16.msra.mxu0 0
    %188 = vmatprep.subr.bf16.mxu0 0
    %189 = vmatpush1.bf16.msra.mxu0 0
    %190 = vmatprep.subr.bf16.mxu0 0
    %191 = vmatpush1.bf16.msra.mxu0 0
    %192 = vmatprep.subr.bf16.mxu0 0
    %193 = vmatpush1.bf16.msra.mxu0 0
    %194 = vmatprep.subr.bf16.mxu0 %v173
    %195 = vmatpush1.bf16.msra.mxu0 %v172
    %196 = vmatprep.subr.bf16.mxu0 %v171
    %197 = vmatpush1.bf16.msra.mxu0 %v170
    %198 = vmatprep.subr.bf16.mxu0 0
    %199 = vmatpush2.bf16.msra.mxu0 0
    %200 = vmatprep.subr.bf16.mxu0 0
    %201 = vmatpush2.bf16.msra.mxu0 0
    %202 = vmatprep.subr.bf16.mxu0 0
    %203 = vmatpush2.bf16.msra.mxu0 0
    %204 = vmatprep.subr.bf16.mxu0 0
    %205 = vmatpush2.bf16.msra.mxu0 0
    %206 = vmatprep.subr.bf16.mxu0 0
    %207 = vmatpush2.bf16.msra.mxu0 0
    %208 = vmatprep.subr.bf16.mxu0 0
    %209 = vmatpush2.bf16.msra.mxu0 0
    %210 = vmatprep.subr.bf16.mxu0 0
    %211 = vmatpush2.bf16.msra.mxu0 0
    %212 = vmatprep.subr.bf16.mxu0 0
    %213 = vmatpush2.bf16.msra.mxu0 0
    %214 = vmatprep.mubr.bf16.mxu0 0
    %215 = vmatmul.mubr.bf16.gmra.mxu0 %v180
    %v216 = vpop.f32.mrf.mxu0
    %v217 = vadd.f32 %v151, %v216
    %v218 = vpop.f32.mrf.mxu0
    %v219 = vadd.f32 %v155, %v218
    %v220 = vpop.f32.mrf.mxu0
    %v221 = vpop.f32.mrf.mxu0
    %222 = vdwg.mxu0
    %v223 = vmax.f32 %v217, 0.0
    %v224 = vmax.f32 %v219, 0.0
    %226 = vrot.lane.b32.xlu0 %v223, 64
    %v227 = vpop.permute.xlu0 %226
    %v229 = vmax.f32 %v223, %v227
    %231 = vrot.lane.b32.xlu0 %v224, 64
    %v232 = vpop.permute.xlu0 %231
    %v234 = vmax.f32 %v224, %v232
    %v235 = vmax.f32 %v229, %v234
    %v236 = vpack.c.bf16 %v235, %v235
    %v237 = vld [vmem:[#allocation8] sm:$0xf]
    %v238 = vld [vmem:[#allocation8 + $0x4] sm:$0xf]
    %v239 = vld [vmem:[#allocation8 + $0x8] sm:$0xf]
    %v240 = vld [vmem:[#allocation8 + $0xc] sm:$0xf]
    %v241 = vld [vmem:[#allocation8 + $0x10] sm:$0xf]
    %v242 = vld [vmem:[#allocation8 + $0x14] sm:$0xf]
    %v243 = vld [vmem:[#allocation8 + $0x18] sm:$0xf]
    %v244 = vld [vmem:[#allocation8 + $0x1c] sm:$0xf]
    %v253 = vunpack.c.l.b16 %v237
    %v254 = vunpack.c.l.b16 %v238
    %v255 = vunpack.c.l.b16 %v239
    %v256 = vunpack.c.l.b16 %v240
    %v257 = vunpack.c.l.b16 %v241
    %v258 = vunpack.c.l.b16 %v242
    %v259 = vunpack.c.l.b16 %v243
    %v260 = vunpack.c.l.b16 %v244
    %v261 = vpack.c.b16 %v254, %v253
    %v262 = vpack.c.b16 %v256, %v255
    %v263 = vpack.c.b16 %v258, %v257
    %v264 = vpack.c.b16 %v260, %v259
    %vm269 = vcmask 523264
    %v271 = vsel %vm269, %v236, 0
    %273 = vmatprep.subr.bf16.mxu0 0
    %274 = vmatpush1.bf16.msra.mxu0 0
    %275 = vmatprep.subr.bf16.mxu0 0
    %276 = vmatpush1.bf16.msra.mxu0 0
    %277 = vmatprep.subr.bf16.mxu0 0
    %278 = vmatpush1.bf16.msra.mxu0 0
    %279 = vmatprep.subr.bf16.mxu0 0
    %280 = vmatpush1.bf16.msra.mxu0 0
    %281 = vmatprep.subr.bf16.mxu0 0
    %282 = vmatpush1.bf16.msra.mxu0 %v264
    %283 = vmatprep.subr.bf16.mxu0 0
    %284 = vmatpush1.bf16.msra.mxu0 %v263
    %285 = vmatprep.subr.bf16.mxu0 0
    %286 = vmatpush1.bf16.msra.mxu0 %v262
    %287 = vmatprep.subr.bf16.mxu0 0
    %288 = vmatpush1.bf16.msra.mxu0 %v261
    %289 = vmatprep.subr.bf16.mxu0 0
    %290 = vmatpush2.bf16.msra.mxu0 0
    %291 = vmatprep.subr.bf16.mxu0 0
    %292 = vmatpush2.bf16.msra.mxu0 0
    %293 = vmatprep.subr.bf16.mxu0 0
    %294 = vmatpush2.bf16.msra.mxu0 0
    %295 = vmatprep.subr.bf16.mxu0 0
    %296 = vmatpush2.bf16.msra.mxu0 0
    %297 = vmatprep.subr.bf16.mxu0 0
    %298 = vmatpush2.bf16.msra.mxu0 0
    %299 = vmatprep.subr.bf16.mxu0 0
    %300 = vmatpush2.bf16.msra.mxu0 0
    %301 = vmatprep.subr.bf16.mxu0 0
    %302 = vmatpush2.bf16.msra.mxu0 0
    %303 = vmatprep.subr.bf16.mxu0 0
    %304 = vmatpush2.bf16.msra.mxu0 0
    %305 = vmatprep.mubr.bf16.mxu0 0
    %306 = vmatmul.mubr.bf16.gmra.mxu0 %v271
    %v307 = vpop.f32.mrf.mxu0
    %v308 = vadd.f32 %v137, %v307
    %v309 = vpop.f32.mrf.mxu0
    %v310 = vpop.f32.mrf.mxu0
    %v311 = vpop.f32.mrf.mxu0
    %312 = vdwg.mxu0
    %v313 = vmax.f32 %v308, 0.0
    %v314 = vld [vmem:[#allocation7] sm:$0xf]
    %v315 = vld [vmem:[#allocation7 + $0x4] sm:$0xf]
    %v316 = vld [vmem:[#allocation7 + $0x8] sm:$0xf]
    %v317 = vld [vmem:[#allocation7 + $0xc] sm:$0xf]
    %v322 = vunpack.c.l.b16 %v314
    %v323 = vunpack.c.l.b16 %v315
    %v324 = vunpack.c.l.b16 %v316
    %v325 = vunpack.c.l.b16 %v317
    %v326 = vpack.c.b16 %v323, %v322
    %v327 = vpack.c.b16 %v325, %v324
    %330 = vmatprep.subr.bf16.mxu0 0
    %331 = vmatpush1.bf16.msra.mxu0 0
    %332 = vmatprep.subr.bf16.mxu0 0
    %333 = vmatpush1.bf16.msra.mxu0 0
    %334 = vmatprep.subr.bf16.mxu0 0
    %335 = vmatpush1.bf16.msra.mxu0 0
    %336 = vmatprep.subr.bf16.mxu0 0
    %337 = vmatpush1.bf16.msra.mxu0 0
    %338 = vmatprep.subr.bf16.mxu0 0
    %339 = vmatpush1.bf16.msra.mxu0 0
    %340 = vmatprep.subr.bf16.mxu0 0
    %341 = vmatpush1.bf16.msra.mxu0 0
    %342 = vmatprep.subr.bf16.mxu0 0
    %343 = vmatpush1.bf16.msra.mxu0 %v327
    %344 = vmatprep.subr.bf16.mxu0 0
    %345 = vmatpush1.bf16.msra.mxu0 %v326
    %346 = vmatprep.subr.bf16.mxu0 0
    %347 = vmatpush2.bf16.msra.mxu0 0
    %348 = vmatprep.subr.bf16.mxu0 0
    %349 = vmatpush2.bf16.msra.mxu0 0
    %350 = vmatprep.subr.bf16.mxu0 0
    %351 = vmatpush2.bf16.msra.mxu0 0
    %352 = vmatprep.subr.bf16.mxu0 0
    %353 = vmatpush2.bf16.msra.mxu0 0
    %354 = vmatprep.subr.bf16.mxu0 0
    %355 = vmatpush2.bf16.msra.mxu0 0
    %356 = vmatprep.subr.bf16.mxu0 0
    %357 = vmatpush2.bf16.msra.mxu0 0
    %358 = vmatprep.subr.bf16.mxu0 0
    %359 = vmatpush2.bf16.msra.mxu0 0
    %360 = vmatprep.subr.bf16.mxu0 0
    %361 = vmatpush2.bf16.msra.mxu0 0
    %362 = vmatprep.mubr.bf16.mxu0 0
    %363 = vmatmul.mubr.bf16.gmra.mxu0 %v180
    %v364 = vpop.f32.mrf.mxu0
    %v365 = vadd.f32 %v138, %v364
    %v366 = vpop.f32.mrf.mxu0
    %v367 = vpop.f32.mrf.mxu0
    %v368 = vpop.f32.mrf.mxu0
    %369 = vdwg.mxu0
    %v370 = vmax.f32 %v365, 0.0
    %v371 = vpack.c.bf16 %v370, %v370
    %v372 = vld [vmem:[#allocation10] sm:$0xf]
    %v373 = vld [vmem:[#allocation10 + $0x4] sm:$0xf]
    %v374 = vld [vmem:[#allocation10 + $0x8] sm:$0xf]
    %v375 = vld [vmem:[#allocation10 + $0xc] sm:$0xf]
    %v376 = vld [vmem:[#allocation10 + $0x10] sm:$0xf]
    %v377 = vld [vmem:[#allocation10 + $0x14] sm:$0xf]
    %v378 = vld [vmem:[#allocation10 + $0x18] sm:$0xf]
    %v379 = vld [vmem:[#allocation10 + $0x1c] sm:$0xf]
    %v388 = vunpack.c.l.b16 %v372
    %v389 = vunpack.c.l.b16 %v373
    %v390 = vunpack.c.l.b16 %v374
    %v391 = vunpack.c.l.b16 %v375
    %v392 = vunpack.c.l.b16 %v376
    %v393 = vunpack.c.l.b16 %v377
    %v394 = vunpack.c.l.b16 %v378
    %v395 = vunpack.c.l.b16 %v379
    %v396 = vpack.c.b16 %v389, %v388
    %v397 = vpack.c.b16 %v391, %v390
    %v398 = vpack.c.b16 %v393, %v392
    %v399 = vpack.c.b16 %v395, %v394
    %v405 = vsel %vm269, %v371, 0
    %407 = vmatprep.subr.bf16.mxu0 0
    %408 = vmatpush1.bf16.msra.mxu0 0
    %409 = vmatprep.subr.bf16.mxu0 0
    %410 = vmatpush1.bf16.msra.mxu0 0
    %411 = vmatprep.subr.bf16.mxu0 0
    %412 = vmatpush1.bf16.msra.mxu0 0
    %413 = vmatprep.subr.bf16.mxu0 0
    %414 = vmatpush1.bf16.msra.mxu0 0
    %415 = vmatprep.subr.bf16.mxu0 0
    %416 = vmatpush1.bf16.msra.mxu0 %v399
    %417 = vmatprep.subr.bf16.mxu0 0
    %418 = vmatpush1.bf16.msra.mxu0 %v398
    %419 = vmatprep.subr.bf16.mxu0 0
    %420 = vmatpush1.bf16.msra.mxu0 %v397
    %421 = vmatprep.subr.bf16.mxu0 0
    %422 = vmatpush1.bf16.msra.mxu0 %v396
    %423 = vmatprep.subr.bf16.mxu0 0
    %424 = vmatpush2.bf16.msra.mxu0 0
    %425 = vmatprep.subr.bf16.mxu0 0
    %426 = vmatpush2.bf16.msra.mxu0 0
    %427 = vmatprep.subr.bf16.mxu0 0
    %428 = vmatpush2.bf16.msra.mxu0 0
    %429 = vmatprep.subr.bf16.mxu0 0
    %430 = vmatpush2.bf16.msra.mxu0 0
    %431 = vmatprep.subr.bf16.mxu0 0
    %432 = vmatpush2.bf16.msra.mxu0 0
    %433 = vmatprep.subr.bf16.mxu0 0
    %434 = vmatpush2.bf16.msra.mxu0 0
    %435 = vmatprep.subr.bf16.mxu0 0
    %436 = vmatpush2.bf16.msra.mxu0 0
    %437 = vmatprep.subr.bf16.mxu0 0
    %438 = vmatpush2.bf16.msra.mxu0 0
    %439 = vmatprep.mubr.bf16.mxu0 0
    %440 = vmatmul.mubr.bf16.gmra.mxu0 %v405
    %v441 = vpop.f32.mrf.mxu0
    %v442 = vadd.f32 0.0, %v441
    %v443 = vpop.f32.mrf.mxu0
    %v444 = vpop.f32.mrf.mxu0
    %v445 = vpop.f32.mrf.mxu0
    %446 = vdwg.mxu0
    %v447 = vpack.c.bf16 %v313, %v313
    %v448 = vld [vmem:[#allocation11] sm:$0xff]
    %v449 = vld [vmem:[#allocation11 + $0x8] sm:$0xff]
    %v450 = vld [vmem:[#allocation11 + $0x10] sm:$0xff]
    %v451 = vld [vmem:[#allocation11 + $0x18] sm:$0xff]
    %v452 = vld [vmem:[#allocation11 + $0x20] sm:$0xff]
    %v453 = vld [vmem:[#allocation11 + $0x28] sm:$0xff]
    %v454 = vld [vmem:[#allocation11 + $0x30] sm:$0xff]
    %v455 = vld [vmem:[#allocation11 + $0x38] sm:$0xff]
    %v456 = vld [vmem:[#allocation11 + $0x40] sm:$0xff]
    %v457 = vld [vmem:[#allocation11 + $0x48] sm:$0xff]
    %v458 = vld [vmem:[#allocation11 + $0x50] sm:$0xff]
    %v459 = vld [vmem:[#allocation11 + $0x58] sm:$0xff]
    %v460 = vld [vmem:[#allocation11 + $0x60] sm:$0xff]
    %v461 = vld [vmem:[#allocation11 + $0x68] sm:$0xff]
    %v462 = vld [vmem:[#allocation11 + $0x70] sm:$0xff]
    %v463 = vld [vmem:[#allocation11 + $0x78] sm:$0xff]
    %v464 = vpack.c.bf16 %v442, %v442
    %v465 = vld [vmem:[#allocation11 + $0x80] sm:$0xff]
    %v466 = vld [vmem:[#allocation11 + $0x88] sm:$0xff]
    %v467 = vld [vmem:[#allocation11 + $0x90] sm:$0xff]
    %v468 = vld [vmem:[#allocation11 + $0x98] sm:$0xff]
    %v469 = vld [vmem:[#allocation11 + $0xa0] sm:$0xff]
    %v470 = vld [vmem:[#allocation11 + $0xa8] sm:$0xff]
    %v471 = vld [vmem:[#allocation11 + $0xb0] sm:$0xff]
    %v472 = vld [vmem:[#allocation11 + $0xb8] sm:$0xff]
    %v481 = vunpack.c.l.b16 %v465
    %v482 = vunpack.c.h.b16 %v465
    %v483 = vunpack.c.l.b16 %v466
    %v484 = vunpack.c.h.b16 %v466
    %v485 = vunpack.c.l.b16 %v467
    %v486 = vunpack.c.h.b16 %v467
    %v487 = vunpack.c.l.b16 %v468
    %v488 = vunpack.c.h.b16 %v468
    %v489 = vunpack.c.l.b16 %v469
    %v490 = vunpack.c.h.b16 %v469
    %v491 = vunpack.c.l.b16 %v470
    %v492 = vunpack.c.h.b16 %v470
    %v493 = vunpack.c.l.b16 %v471
    %v494 = vunpack.c.h.b16 %v471
    %v495 = vunpack.c.l.b16 %v472
    %v496 = vunpack.c.h.b16 %v472
    %v497 = vpack.c.b16 %v483, %v481
    %v498 = vpack.c.b16 %v484, %v482
    %v499 = vpack.c.b16 %v487, %v485
    %v500 = vpack.c.b16 %v488, %v486
    %v501 = vpack.c.b16 %v491, %v489
    %v502 = vpack.c.b16 %v492, %v490
    %v503 = vpack.c.b16 %v495, %v493
    %v504 = vpack.c.b16 %v496, %v494
    %v514 = vsel %vm269, %v464, 0
    %516 = vmatprep.subr.bf16.mxu0 0
    %517 = vmatpush1.bf16.msra.mxu0 0
    %518 = vmatprep.subr.bf16.mxu0 0
    %519 = vmatpush1.bf16.msra.mxu0 0
    %520 = vmatprep.subr.bf16.mxu0 0
    %521 = vmatpush1.bf16.msra.mxu0 0
    %522 = vmatprep.subr.bf16.mxu0 0
    %523 = vmatpush1.bf16.msra.mxu0 0
    %524 = vmatprep.subr.bf16.mxu0 %v504
    %525 = vmatpush1.bf16.msra.mxu0 %v503
    %526 = vmatprep.subr.bf16.mxu0 %v502
    %527 = vmatpush1.bf16.msra.mxu0 %v501
    %528 = vmatprep.subr.bf16.mxu0 %v500
    %529 = vmatpush1.bf16.msra.mxu0 %v499
    %530 = vmatprep.subr.bf16.mxu0 %v498
    %531 = vmatpush1.bf16.msra.mxu0 %v497
    %532 = vmatprep.subr.bf16.mxu0 0
    %533 = vmatpush2.bf16.msra.mxu0 0
    %534 = vmatprep.subr.bf16.mxu0 0
    %535 = vmatpush2.bf16.msra.mxu0 0
    %536 = vmatprep.subr.bf16.mxu0 0
    %537 = vmatpush2.bf16.msra.mxu0 0
    %538 = vmatprep.subr.bf16.mxu0 0
    %539 = vmatpush2.bf16.msra.mxu0 0
    %540 = vmatprep.subr.bf16.mxu0 0
    %541 = vmatpush2.bf16.msra.mxu0 0
    %542 = vmatprep.subr.bf16.mxu0 0
    %543 = vmatpush2.bf16.msra.mxu0 0
    %544 = vmatprep.subr.bf16.mxu0 0
    %545 = vmatpush2.bf16.msra.mxu0 0
    %546 = vmatprep.subr.bf16.mxu0 0
    %547 = vmatpush2.bf16.msra.mxu0 0
    %548 = vmatprep.mubr.bf16.mxu0 0
    %549 = vmatmul.mubr.bf16.gmra.mxu0 %v514
    %v550 = vpop.f32.mrf.mxu0
    %v551 = vadd.f32 0.0, %v550
    %v552 = vpop.f32.mrf.mxu0
    %v553 = vadd.f32 0.0, %v552
    %v554 = vpop.f32.mrf.mxu0
    %v555 = vpop.f32.mrf.mxu0
    %556 = vdwg.mxu0
    %v573 = vunpack.c.l.b16 %v448
    %v574 = vunpack.c.h.b16 %v448
    %v575 = vunpack.c.l.b16 %v449
    %v576 = vunpack.c.h.b16 %v449
    %v577 = vunpack.c.l.b16 %v450
    %v578 = vunpack.c.h.b16 %v450
    %v579 = vunpack.c.l.b16 %v451
    %v580 = vunpack.c.h.b16 %v451
    %v581 = vunpack.c.l.b16 %v452
    %v582 = vunpack.c.h.b16 %v452
    %v583 = vunpack.c.l.b16 %v453
    %v584 = vunpack.c.h.b16 %v453
    %v585 = vunpack.c.l.b16 %v454
    %v586 = vunpack.c.h.b16 %v454
    %v587 = vunpack.c.l.b16 %v455
    %v588 = vunpack.c.h.b16 %v455
    %v589 = vunpack.c.l.b16 %v456
    %v590 = vunpack.c.h.b16 %v456
    %v591 = vunpack.c.l.b16 %v457
    %v592 = vunpack.c.h.b16 %v457
    %v593 = vunpack.c.l.b16 %v458
    %v594 = vunpack.c.h.b16 %v458
    %v595 = vunpack.c.l.b16 %v459
    %v596 = vunpack.c.h.b16 %v459
    %v597 = vunpack.c.l.b16 %v460
    %v598 = vunpack.c.h.b16 %v460
    %v599 = vunpack.c.l.b16 %v461
    %v600 = vunpack.c.h.b16 %v461
    %v601 = vunpack.c.l.b16 %v462
    %v602 = vunpack.c.h.b16 %v462
    %v603 = vunpack.c.l.b16 %v463
    %v604 = vunpack.c.h.b16 %v463
    %v605 = vpack.c.b16 %v575, %v573
    %v606 = vpack.c.b16 %v576, %v574
    %v607 = vpack.c.b16 %v579, %v577
    %v608 = vpack.c.b16 %v580, %v578
    %v609 = vpack.c.b16 %v583, %v581
    %v610 = vpack.c.b16 %v584, %v582
    %v611 = vpack.c.b16 %v587, %v585
    %v612 = vpack.c.b16 %v588, %v586
    %v613 = vpack.c.b16 %v591, %v589
    %v614 = vpack.c.b16 %v592, %v590
    %v615 = vpack.c.b16 %v595, %v593
    %v616 = vpack.c.b16 %v596, %v594
    %v617 = vpack.c.b16 %v599, %v597
    %v618 = vpack.c.b16 %v600, %v598
    %v619 = vpack.c.b16 %v603, %v601
    %v620 = vpack.c.b16 %v604, %v602
    %637 = vmatprep.subr.bf16.mxu0 %v620
    %638 = vmatpush1.bf16.msra.mxu0 %v619
    %639 = vmatprep.subr.bf16.mxu0 %v618
    %640 = vmatpush1.bf16.msra.mxu0 %v617
    %641 = vmatprep.subr.bf16.mxu0 %v616
    %642 = vmatpush1.bf16.msra.mxu0 %v615
    %643 = vmatprep.subr.bf16.mxu0 %v614
    %644 = vmatpush1.bf16.msra.mxu0 %v613
    %645 = vmatprep.subr.bf16.mxu0 %v612
    %646 = vmatpush1.bf16.msra.mxu0 %v611
    %647 = vmatprep.subr.bf16.mxu0 %v610
    %648 = vmatpush1.bf16.msra.mxu0 %v609
    %649 = vmatprep.subr.bf16.mxu0 %v608
    %650 = vmatpush1.bf16.msra.mxu0 %v607
    %651 = vmatprep.subr.bf16.mxu0 %v606
    %652 = vmatpush1.bf16.msra.mxu0 %v605
    %653 = vmatprep.subr.bf16.mxu0 0
    %654 = vmatpush2.bf16.msra.mxu0 0
    %655 = vmatprep.subr.bf16.mxu0 0
    %656 = vmatpush2.bf16.msra.mxu0 0
    %657 = vmatprep.subr.bf16.mxu0 0
    %658 = vmatpush2.bf16.msra.mxu0 0
    %659 = vmatprep.subr.bf16.mxu0 0
    %660 = vmatpush2.bf16.msra.mxu0 0
    %661 = vmatprep.subr.bf16.mxu0 0
    %662 = vmatpush2.bf16.msra.mxu0 0
    %663 = vmatprep.subr.bf16.mxu0 0
    %664 = vmatpush2.bf16.msra.mxu0 0
    %665 = vmatprep.subr.bf16.mxu0 0
    %666 = vmatpush2.bf16.msra.mxu0 0
    %667 = vmatprep.subr.bf16.mxu0 0
    %668 = vmatpush2.bf16.msra.mxu0 0
    %669 = vmatprep.mubr.bf16.mxu0 0
    %670 = vmatmul.mubr.bf16.gmra.mxu0 %v447
    %v671 = vpop.f32.mrf.mxu0
    %v672 = vadd.f32 %v551, %v671
    %v673 = vpop.f32.mrf.mxu0
    %v674 = vadd.f32 %v553, %v673
    %v675 = vpop.f32.mrf.mxu0
    %v676 = vpop.f32.mrf.mxu0
    %677 = vdwg.mxu0
    %v679 = vlaneseq
    %v680 = vshrl.u32 %v679, 7
    %v681 = vsub.s32 0, %v680
    %v682 = vrot.slane %v140, %v681
    %v683 = vlaneseq
    %v684 = vshrl.u32 %v683, 7
    %v685 = vsub.s32 1, %v684
    %v686 = vrot.slane %v140, %v685
    %v689 = vadd.f32 %v672, %v682
    %v690 = vadd.f32 %v674, %v686
    %v691 = vmax.f32 %v689, 0.0
    %v692 = vmax.f32 %v690, 0.0
    %v693 = vpack.c.bf16 %v691, %v691
    %v694 = vpack.c.bf16 %v692, %v692
    %v695 = vld [vmem:[#allocation13] sm:$0xf]
    %v696 = vld [vmem:[#allocation13 + $0x4] sm:$0xf]
    %v697 = vld [vmem:[#allocation13 + $0x8] sm:$0xf]
    %v698 = vld [vmem:[#allocation13 + $0xc] sm:$0xf]
    %v699 = vld [vmem:[#allocation13 + $0x10] sm:$0xf]
    %v700 = vld [vmem:[#allocation13 + $0x14] sm:$0xf]
    %v701 = vld [vmem:[#allocation13 + $0x18] sm:$0xf]
    %v702 = vld [vmem:[#allocation13 + $0x1c] sm:$0xf]
    %v703 = vld [vmem:[#allocation13 + $0x20] sm:$0xf]
    %v704 = vld [vmem:[#allocation13 + $0x24] sm:$0xf]
    %v705 = vld [vmem:[#allocation13 + $0x28] sm:$0xf]
    %v706 = vld [vmem:[#allocation13 + $0x2c] sm:$0xf]
    %v707 = vld [vmem:[#allocation13 + $0x30] sm:$0xf]
    %v708 = vld [vmem:[#allocation13 + $0x34] sm:$0xf]
    %v709 = vld [vmem:[#allocation13 + $0x38] sm:$0xf]
    %v710 = vld [vmem:[#allocation13 + $0x3c] sm:$0xf]
    %v711 = vld [vmem:[#allocation13 + $0x40] sm:$0xf]
    %v712 = vld [vmem:[#allocation13 + $0x44] sm:$0xf]
    %v713 = vld [vmem:[#allocation13 + $0x48] sm:$0xf]
    %v714 = vld [vmem:[#allocation13 + $0x4c] sm:$0xf]
    %v715 = vld [vmem:[#allocation13 + $0x50] sm:$0xf]
    %v716 = vld [vmem:[#allocation13 + $0x54] sm:$0xf]
    %v717 = vld [vmem:[#allocation13 + $0x58] sm:$0xf]
    %v718 = vld [vmem:[#allocation13 + $0x5c] sm:$0xf]
    %v719 = vld [vmem:[#allocation13 + $0x60] sm:$0xf]
    %v720 = vld [vmem:[#allocation13 + $0x64] sm:$0xf]
    %v721 = vld [vmem:[#allocation13 + $0x68] sm:$0xf]
    %v722 = vld [vmem:[#allocation13 + $0x6c] sm:$0xf]
    %v723 = vld [vmem:[#allocation13 + $0x70] sm:$0xf]
    %v724 = vld [vmem:[#allocation13 + $0x74] sm:$0xf]
    %v725 = vld [vmem:[#allocation13 + $0x78] sm:$0xf]
    %v726 = vld [vmem:[#allocation13 + $0x7c] sm:$0xf]
    %v759 = vunpack.c.l.b16 %v695
    %v760 = vunpack.c.l.b16 %v696
    %v761 = vunpack.c.l.b16 %v697
    %v762 = vunpack.c.l.b16 %v698
    %v763 = vunpack.c.l.b16 %v699
    %v764 = vunpack.c.l.b16 %v700
    %v765 = vunpack.c.l.b16 %v701
    %v766 = vunpack.c.l.b16 %v702
    %v767 = vunpack.c.l.b16 %v703
    %v768 = vunpack.c.l.b16 %v704
    %v769 = vunpack.c.l.b16 %v705
    %v770 = vunpack.c.l.b16 %v706
    %v771 = vunpack.c.l.b16 %v707
    %v772 = vunpack.c.l.b16 %v708
    %v773 = vunpack.c.l.b16 %v709
    %v774 = vunpack.c.l.b16 %v710
    %v775 = vunpack.c.l.b16 %v711
    %v776 = vunpack.c.l.b16 %v712
    %v777 = vunpack.c.l.b16 %v713
    %v778 = vunpack.c.l.b16 %v714
    %v779 = vunpack.c.l.b16 %v715
    %v780 = vunpack.c.l.b16 %v716
    %v781 = vunpack.c.l.b16 %v717
    %v782 = vunpack.c.l.b16 %v718
    %v783 = vunpack.c.l.b16 %v719
    %v784 = vunpack.c.l.b16 %v720
    %v785 = vunpack.c.l.b16 %v721
    %v786 = vunpack.c.l.b16 %v722
    %v787 = vunpack.c.l.b16 %v723
    %v788 = vunpack.c.l.b16 %v724
    %v789 = vunpack.c.l.b16 %v725
    %v790 = vunpack.c.l.b16 %v726
    %v791 = vpack.c.b16 %v760, %v759
    %v792 = vpack.c.b16 %v762, %v761
    %v793 = vpack.c.b16 %v764, %v763
    %v794 = vpack.c.b16 %v766, %v765
    %v795 = vpack.c.b16 %v768, %v767
    %v796 = vpack.c.b16 %v770, %v769
    %v797 = vpack.c.b16 %v772, %v771
    %v798 = vpack.c.b16 %v774, %v773
    %v799 = vpack.c.b16 %v776, %v775
    %v800 = vpack.c.b16 %v778, %v777
    %v801 = vpack.c.b16 %v780, %v779
    %v802 = vpack.c.b16 %v782, %v781
    %v803 = vpack.c.b16 %v784, %v783
    %v804 = vpack.c.b16 %v786, %v785
    %v805 = vpack.c.b16 %v788, %v787
    %v806 = vpack.c.b16 %v790, %v789
    %823 = vmatprep.subr.bf16.mxu0 0
    %824 = vmatpush1.bf16.msra.mxu0 %v798
    %825 = vmatprep.subr.bf16.mxu0 0
    %826 = vmatpush1.bf16.msra.mxu0 %v797
    %827 = vmatprep.subr.bf16.mxu0 0
    %828 = vmatpush1.bf16.msra.mxu0 %v796
    %829 = vmatprep.subr.bf16.mxu0 0
    %830 = vmatpush1.bf16.msra.mxu0 %v795
    %831 = vmatprep.subr.bf16.mxu0 0
    %832 = vmatpush1.bf16.msra.mxu0 %v794
    %833 = vmatprep.subr.bf16.mxu0 0
    %834 = vmatpush1.bf16.msra.mxu0 %v793
    %835 = vmatprep.subr.bf16.mxu0 0
    %836 = vmatpush1.bf16.msra.mxu0 %v792
    %837 = vmatprep.subr.bf16.mxu0 0
    %838 = vmatpush1.bf16.msra.mxu0 %v791
    %839 = vmatprep.subr.bf16.mxu0 0
    %840 = vmatpush2.bf16.msra.mxu0 %v806
    %841 = vmatprep.subr.bf16.mxu0 0
    %842 = vmatpush2.bf16.msra.mxu0 %v805
    %843 = vmatprep.subr.bf16.mxu0 0
    %844 = vmatpush2.bf16.msra.mxu0 %v804
    %845 = vmatprep.subr.bf16.mxu0 0
    %846 = vmatpush2.bf16.msra.mxu0 %v803
    %847 = vmatprep.subr.bf16.mxu0 0
    %848 = vmatpush2.bf16.msra.mxu0 %v802
    %849 = vmatprep.subr.bf16.mxu0 0
    %850 = vmatpush2.bf16.msra.mxu0 %v801
    %851 = vmatprep.subr.bf16.mxu0 0
    %852 = vmatpush2.bf16.msra.mxu0 %v800
    %853 = vmatprep.subr.bf16.mxu0 0
    %854 = vmatpush2.bf16.msra.mxu0 %v799
    %855 = vmatprep.mubr.bf16.mxu0 %v694
    %856 = vmatmul.mubr.bf16.gmra.mxu0 %v693
    %v857 = vpop.f32.mrf.mxu0
    %v858 = vadd.f32 %v141, %v857
    %v859 = vpop.f32.mrf.mxu0
    %v860 = vpop.f32.mrf.mxu0
    %v861 = vpop.f32.mrf.mxu0
    %862 = vdwg.mxu0
    %863 = vst [vmem:[#allocation16] sm:$0xff] %v858
    // Predicated region
    $region66: #{tpu_custom_call.1} parent=1 // pred_check
      _
    $region67: #{tpu_custom_call.1} parent=1 // pred_check_branch
      %865 = sbr.rel (0) target = $region69
    $region68: #{tpu_custom_call.1} parent=1 // pred_region
      %s867 = ssub.s32 128, 128
      %868 = vsyncadd [#allocation4], %s867
      %s870 = sshll.u32 [#allocation16], 4
      %s871 = int_to_ptr.vmem [resolvable:$true] %s870
      %873 = dma.vmem_to_hbm [thread:$0]  %s871, 128, %s8, [#allocation4]
    $region69: #{tpu_custom_call.1} parent=1 // pred_fallthru
      _
    // Predicated region
    $region70: #{tpu_custom_call.1} parent=1 // pred_check
      _
    $region71: #{tpu_custom_call.1} parent=1 // pred_check_branch
      %875 = sbr.rel (0) target = $region73
    $region72: #{tpu_custom_call.1} parent=1 // pred_region
      %876 = dma.done [#allocation4], 128
    $region73: #{tpu_custom_call.1} parent=1 // pred_fallthru
      _
    %877 = vsyncpa [#allocation3], 1
    %878 = vsyncpa [#allocation6], 1
    %879 = vsyncpa [#allocation9], 1
    %880 = vsyncpa [#allocation12], 1
    %881 = vsyncpa [#allocation15], 1
    %882 = vsyncpa [#allocation4], 1

</llo_original>
